<compile_context>
chip_gen: v6e
topology: v6e:2x2x1
jax: 0.10.0
libtpu: 0.0.40
codegen_flags: <defaults>
</compile_context>

<pallas_src>
import jax
import jax.numpy as jnp
import numpy as np
from jax.experimental import pallas as pl
from jax.experimental.pallas import tpu as pltpu

BP = 8  # padded batch rows (one sublane group) -> aligned per-step slices


def build_lstm_fixed(vocab_size, embedding_dim, hidden_dim, out_dim):
    """Build (prepare_params, forward) for static module hyperparameters."""
    H = hidden_dim
    G = 4 * H                                   # gate width = lane dim of packed rows
    assert out_dim <= G and G % 128 == 0
    VP = ((vocab_size + 63) // 64) * 64         # padded vocab (one-hot K dim)
    ROWS = -(-(VP + 2 * H + 1) // 8) * 8        # packed-parameter rows (sublane aligned)

    # ---------------- One-time parameter prep (NOT in the per-call path) ----
    def prepare_params(emb_table, w_ih, w_hh, b, w_out, b_out):
        def reorder(w):  # PyTorch gate order [i,f,g,o] -> kernel order [i,f,o,g]
            i, f, g, o = jnp.split(w, 4, axis=-1)
            return jnp.concatenate([i, f, o, g], axis=-1)

        w_ih_r, w_hh_r, b_r = reorder(w_ih), reorder(w_hh), reorder(b)
        # Fold input projection + bias into the embedding table. Assumes every
        # token id is in [0, vocab_size) (an OOB id would silently drop the bias).
        table = emb_table.astype(jnp.float32) @ w_ih_r + b_r        # (V, 4H)

        packed = jnp.zeros((ROWS, G), jnp.float32)
        packed = packed.at[:vocab_size, :].set(table)                # rows [0, V)
        packed = packed.at[VP:VP + H, :].set(w_hh_r)                 # rows [VP, VP+H)
        packed = packed.at[VP + H:VP + 2 * H, :out_dim].set(w_out)   # rows [VP+H, VP+2H)
        packed = packed.at[VP + 2 * H, :out_dim].set(b_out[0])       # row  VP+2H
        return packed

    # ---------------- Kernel --------------------------------------------------
    def make_kernel(T, B):
        def kernel(tok_ref, params_ref, out_ref):
            # Carve packed constants out with static (free) sublane slices.
            table = params_ref[pl.ds(0, VP), :]                     # (VP, 4H)
            whh = params_ref[pl.ds(VP, H), :]                       # (H, 4H)
            wout = params_ref[pl.ds(VP + H, H), :]                  # (H, G) zero-padded
            bout = params_ref[pl.ds(VP + 2 * H, 1), :]              # (1, G) zero-padded

            # Phase 0 (no serial dependence on h): one-hot gather of the
            # pre-projected, bias-folded embedding rows. Padded batch rows carry
            # id = -1 -> all-zero one-hot rows -> zero x_proj rows.
            ids = tok_ref[...]                                       # (T*BP, 1) int32
            onehot = (ids == jax.lax.broadcasted_iota(
                jnp.int32, (T * BP, VP), 1)).astype(jnp.float32)     # (T*BP, VP)
            x_proj = jnp.dot(onehot, table,
                             preferred_element_type=jnp.float32)     # (T*BP, 4H)

            # Loop invariants hoisted (JAX does not CSE iota/broadcast in loops).
            is_g = jax.lax.broadcasted_iota(jnp.int32, (BP, G), 1) >= 3 * H

            # Recurrence: statically unrolled, h/c stay in vregs; every per-step
            # x_proj slice starts at sublane 0 (offsets are multiples of BP=8).
            h = jnp.zeros((BP, H), jnp.float32)
            c = jnp.zeros((BP, H), jnp.float32)
            for t in range(T):
                gates = x_proj[t * BP:(t + 1) * BP, :] + jnp.dot(
                    h, whh, preferred_element_type=jnp.float32)      # (BP, 4H)
                # Full-vreg EUP passes + one VPU select (no pre-EUP lane slices).
                act = jnp.where(is_g, jnp.tanh(gates), jax.nn.sigmoid(gates))
                i_g = act[:, 0 * H:1 * H]
                f_g = act[:, 1 * H:2 * H]
                o_g = act[:, 2 * H:3 * H]
                g_g = act[:, 3 * H:4 * H]
                c = f_g * c + i_g * g_g
                h = o_g * jnp.tanh(c)

            # Final linear classifier (w_out/b_out zero-padded to G lanes).
            res = jnp.dot(h, wout, preferred_element_type=jnp.float32) + bout
            # out_dim=8 < 128 -> masked store; consciously accepted at this size.
            out_ref[...] = res[:B, :out_dim].astype(out_ref.dtype)

        return kernel

    @jax.jit
    def forward(token_ids, packed_params):
        B, T = token_ids.shape
        assert B <= BP
        # Per-call work: only the token transpose + pad to BP sublanes.
        ids_tm = jnp.transpose(token_ids).astype(jnp.int32)          # (T, B)
        ids_pad = jnp.pad(ids_tm, ((0, 0), (0, BP - B)),
                          constant_values=-1).reshape(T * BP, 1)

        vmem = pl.BlockSpec(memory_space=pltpu.MemorySpace.VMEM)
        return pl.pallas_call(
            make_kernel(T, B),
            out_shape=jax.ShapeDtypeStruct((B, out_dim), jnp.float32),
            # No grid: single invocation, everything resident in VMEM.
            in_specs=[vmem, vmem],
            out_specs=vmem,
        )(ids_pad, packed_params)

    return prepare_params, forward


def reference_forward(token_ids, emb_table, w_ih, w_hh, b, w_out, b_out):
    """Pure-JAX reference (same math, PyTorch [i,f,g,o] gate order)."""
    emb = emb_table[token_ids]                      # (B, T, E)
    B, T, E = emb.shape
    H = w_hh.shape[0]

    def step(carry, x_t):
        h, c = carry
        gates = x_t @ w_ih + h @ w_hh + b[0]
        i = jax.nn.sigmoid(gates[:, 0 * H:1 * H])
        f = jax.nn.sigmoid(gates[:, 1 * H:2 * H])
        g = jnp.tanh(gates[:, 2 * H:3 * H])
        o = jax.nn.sigmoid(gates[:, 3 * H:4 * H])
        c = f * c + i * g
        h = o * jnp.tanh(c)
        return (h, c), None

    h0 = jnp.zeros((B, H), jnp.float32)
    c0 = jnp.zeros((B, H), jnp.float32)
    (hT, _), _ = jax.lax.scan(step, (h0, c0), jnp.transpose(emb, (1, 0, 2)))
    return hT @ w_out + b_out[0]


if __name__ == "__main__":
    # Module hyperparameters (small, consistent with the forward pass).
    vocab_size, embedding_dim, hidden_dim, out_dim = 50, 16, 32, 8
    batch, seq = 2, 8

    key = jax.random.PRNGKey(0)
    k_tok, k_emb, k_wih, k_whh, k_b, k_wo, k_bo = jax.random.split(key, 7)

    token_ids = jax.random.randint(k_tok, (batch, seq), 0, vocab_size)

    # Deterministic parameter init (shapes from nn.Embedding / nn.LSTM / nn.Linear,
    # weights pre-transposed to (in, out); b is the fused b_ih + b_hh).
    emb_table = jax.random.normal(k_emb, (vocab_size, embedding_dim), jnp.float32)
    emb_table = emb_table.at[0].set(0.0)            # padding_idx=0
    s = 1.0 / np.sqrt(hidden_dim)
    w_ih = jax.random.uniform(k_wih, (embedding_dim, 4 * hidden_dim), jnp.float32, -s, s)
    w_hh = jax.random.uniform(k_whh, (hidden_dim, 4 * hidden_dim), jnp.float32, -s, s)
    b = jax.random.uniform(k_b, (1, 4 * hidden_dim), jnp.float32, -s, s)
    w_out = jax.random.uniform(k_wo, (hidden_dim, out_dim), jnp.float32, -s, s)
    b_out = jax.random.uniform(k_bo, (1, out_dim), jnp.float32, -s, s)

    # TODO(synk): nn.Dropout(p=0.2) is implemented with inference semantics
    # (identity); training-mode stochastic masking is intentionally omitted.

    prepare_params, lstm_fixed_forward = build_lstm_fixed(
        vocab_size, embedding_dim, hidden_dim, out_dim)

    packed = prepare_params(emb_table, w_ih, w_hh, b, w_out, b_out)  # one-time
    packed = jax.block_until_ready(packed)

    out = lstm_fixed_forward(token_ids, packed)
    out = jax.block_until_ready(out)

    ref = reference_forward(token_ids, emb_table, w_ih, w_hh, b, w_out, b_out)
    np.testing.assert_allclose(np.asarray(out), np.asarray(ref), rtol=1e-3, atol=1e-3)

    print("KERNEL_OK")
</pallas_src>

<mosaic_0001>
module attributes {stable_mosaic.version = 11 : i64} {
  func.func @kernel(%arg0: memref<64x1xi32, #tpu.memory_space<vmem>>, %arg1: memref<136x128xf32, #tpu.memory_space<vmem>>, %arg2: memref<2x8xf32, #tpu.memory_space<vmem>>) attributes {dimension_semantics = [], scalar_prefetch = 0 : i64, scratch_operands = 0 : i64, tpu.core_type = #tpu.core_type<tc>} {
    %c0 = arith.constant 0 : index
    %c0_0 = arith.constant 0 : index
    %0 = vector.load %arg1[%c0, %c0_0] : memref<136x128xf32, #tpu.memory_space<vmem>>, vector<64x128xf32>
    %c64 = arith.constant 64 : index
    %c0_1 = arith.constant 0 : index
    %1 = vector.load %arg1[%c64, %c0_1] : memref<136x128xf32, #tpu.memory_space<vmem>>, vector<32x128xf32>
    %c96 = arith.constant 96 : index
    %c0_2 = arith.constant 0 : index
    %2 = vector.load %arg1[%c96, %c0_2] : memref<136x128xf32, #tpu.memory_space<vmem>>, vector<32x128xf32>
    %c128 = arith.constant 128 : index
    %c0_3 = arith.constant 0 : index
    %3 = vector.load %arg1[%c128, %c0_3] : memref<136x128xf32, #tpu.memory_space<vmem>>, vector<1x128xf32>
    %c0_4 = arith.constant 0 : index
    %c0_5 = arith.constant 0 : index
    %4 = vector.load %arg0[%c0_4, %c0_5] : memref<64x1xi32, #tpu.memory_space<vmem>>, vector<64x1xi32>
    %5 = tpu.iota {dimensions = array<i32: 1>} : vector<64x64xi32>
    %6 = vector.broadcast %4 : vector<64x1xi32> to vector<64x64xi32>
    %7 = arith.cmpi eq, %6, %5 : vector<64x64xi32>
    %8 = arith.extui %7 : vector<64x64xi1> to vector<64x64xi32>
    %9 = arith.sitofp %8 : vector<64x64xi32> to vector<64x64xf32>
    %cst = arith.constant dense<0.000000e+00> : vector<64x128xf32>
    %10 = tpu.matmul %9, %0, %cst {dimension_numbers = #tpu.dot_dimension_numbers<[1], [0], [0], [1], [0, 0, 1, 1], [], []>} : vector<64x64xf32>, vector<64x128xf32>, vector<64x128xf32> -> vector<64x128xf32>
    %11 = tpu.iota {dimensions = array<i32: 1>} : vector<8x128xi32>
    %c96_i32 = arith.constant 96 : i32
    %12 = vector.broadcast %c96_i32 : i32 to vector<8x128xi32>
    %13 = arith.cmpi sge, %11, %12 : vector<8x128xi32>
    %cst_6 = arith.constant 0.000000e+00 : f32
    %14 = vector.broadcast %cst_6 : f32 to vector<8x32xf32>
    %cst_7 = arith.constant 0.000000e+00 : f32
    %15 = vector.broadcast %cst_7 : f32 to vector<8x32xf32>
    %16 = vector.extract_strided_slice %10 {offsets = [0, 0], sizes = [8, 128], strides = [1, 1]} : vector<64x128xf32> to vector<8x128xf32>
    %cst_8 = arith.constant dense<0.000000e+00> : vector<8x128xf32>
    %17 = tpu.matmul %14, %1, %cst_8 {dimension_numbers = #tpu.dot_dimension_numbers<[1], [0], [0], [1], [0, 0, 1, 1], [], []>} : vector<8x32xf32>, vector<32x128xf32>, vector<8x128xf32> -> vector<8x128xf32>
    %18 = arith.addf %16, %17 : vector<8x128xf32>
    %19 = math.tanh %18 : vector<8x128xf32>
    %20 = arith.negf %18 : vector<8x128xf32>
    %21 = math.exp %20 : vector<8x128xf32>
    %cst_9 = arith.constant 1.000000e+00 : f32
    %22 = vector.broadcast %cst_9 : f32 to vector<8x128xf32>
    %23 = arith.addf %22, %21 : vector<8x128xf32>
    %24 = arith.divf %22, %23 : vector<8x128xf32>
    %25 = arith.select %13, %19, %24 : vector<8x128xi1>, vector<8x128xf32>
    %26 = vector.extract_strided_slice %25 {offsets = [0, 0], sizes = [8, 32], strides = [1, 1]} : vector<8x128xf32> to vector<8x32xf32>
    %27 = vector.extract_strided_slice %25 {offsets = [0, 32], sizes = [8, 32], strides = [1, 1]} : vector<8x128xf32> to vector<8x32xf32>
    %28 = vector.extract_strided_slice %25 {offsets = [0, 64], sizes = [8, 32], strides = [1, 1]} : vector<8x128xf32> to vector<8x32xf32>
    %29 = vector.extract_strided_slice %25 {offsets = [0, 96], sizes = [8, 32], strides = [1, 1]} : vector<8x128xf32> to vector<8x32xf32>
    %30 = arith.mulf %27, %15 : vector<8x32xf32>
    %31 = arith.mulf %26, %29 : vector<8x32xf32>
    %32 = arith.addf %30, %31 : vector<8x32xf32>
    %33 = math.tanh %32 : vector<8x32xf32>
    %34 = arith.mulf %28, %33 : vector<8x32xf32>
    %35 = vector.extract_strided_slice %10 {offsets = [8, 0], sizes = [8, 128], strides = [1, 1]} : vector<64x128xf32> to vector<8x128xf32>
    %cst_10 = arith.constant dense<0.000000e+00> : vector<8x128xf32>
    %36 = tpu.matmul %34, %1, %cst_10 {dimension_numbers = #tpu.dot_dimension_numbers<[1], [0], [0], [1], [0, 0, 1, 1], [], []>} : vector<8x32xf32>, vector<32x128xf32>, vector<8x128xf32> -> vector<8x128xf32>
    %37 = arith.addf %35, %36 : vector<8x128xf32>
    %38 = math.tanh %37 : vector<8x128xf32>
    %39 = arith.negf %37 : vector<8x128xf32>
    %40 = math.exp %39 : vector<8x128xf32>
    %cst_11 = arith.constant 1.000000e+00 : f32
    %41 = vector.broadcast %cst_11 : f32 to vector<8x128xf32>
    %42 = arith.addf %41, %40 : vector<8x128xf32>
    %43 = arith.divf %41, %42 : vector<8x128xf32>
    %44 = arith.select %13, %38, %43 : vector<8x128xi1>, vector<8x128xf32>
    %45 = vector.extract_strided_slice %44 {offsets = [0, 0], sizes = [8, 32], strides = [1, 1]} : vector<8x128xf32> to vector<8x32xf32>
    %46 = vector.extract_strided_slice %44 {offsets = [0, 32], sizes = [8, 32], strides = [1, 1]} : vector<8x128xf32> to vector<8x32xf32>
    %47 = vector.extract_strided_slice %44 {offsets = [0, 64], sizes = [8, 32], strides = [1, 1]} : vector<8x128xf32> to vector<8x32xf32>
    %48 = vector.extract_strided_slice %44 {offsets = [0, 96], sizes = [8, 32], strides = [1, 1]} : vector<8x128xf32> to vector<8x32xf32>
    %49 = arith.mulf %46, %32 : vector<8x32xf32>
    %50 = arith.mulf %45, %48 : vector<8x32xf32>
    %51 = arith.addf %49, %50 : vector<8x32xf32>
    %52 = math.tanh %51 : vector<8x32xf32>
    %53 = arith.mulf %47, %52 : vector<8x32xf32>
    %54 = vector.extract_strided_slice %10 {offsets = [16, 0], sizes = [8, 128], strides = [1, 1]} : vector<64x128xf32> to vector<8x128xf32>
    %cst_12 = arith.constant dense<0.000000e+00> : vector<8x128xf32>
    %55 = tpu.matmul %53, %1, %cst_12 {dimension_numbers = #tpu.dot_dimension_numbers<[1], [0], [0], [1], [0, 0, 1, 1], [], []>} : vector<8x32xf32>, vector<32x128xf32>, vector<8x128xf32> -> vector<8x128xf32>
    %56 = arith.addf %54, %55 : vector<8x128xf32>
    %57 = math.tanh %56 : vector<8x128xf32>
    %58 = arith.negf %56 : vector<8x128xf32>
    %59 = math.exp %58 : vector<8x128xf32>
    %cst_13 = arith.constant 1.000000e+00 : f32
    %60 = vector.broadcast %cst_13 : f32 to vector<8x128xf32>
    %61 = arith.addf %60, %59 : vector<8x128xf32>
    %62 = arith.divf %60, %61 : vector<8x128xf32>
    %63 = arith.select %13, %57, %62 : vector<8x128xi1>, vector<8x128xf32>
    %64 = vector.extract_strided_slice %63 {offsets = [0, 0], sizes = [8, 32], strides = [1, 1]} : vector<8x128xf32> to vector<8x32xf32>
    %65 = vector.extract_strided_slice %63 {offsets = [0, 32], sizes = [8, 32], strides = [1, 1]} : vector<8x128xf32> to vector<8x32xf32>
    %66 = vector.extract_strided_slice %63 {offsets = [0, 64], sizes = [8, 32], strides = [1, 1]} : vector<8x128xf32> to vector<8x32xf32>
    %67 = vector.extract_strided_slice %63 {offsets = [0, 96], sizes = [8, 32], strides = [1, 1]} : vector<8x128xf32> to vector<8x32xf32>
    %68 = arith.mulf %65, %51 : vector<8x32xf32>
    %69 = arith.mulf %64, %67 : vector<8x32xf32>
    %70 = arith.addf %68, %69 : vector<8x32xf32>
    %71 = math.tanh %70 : vector<8x32xf32>
    %72 = arith.mulf %66, %71 : vector<8x32xf32>
    %73 = vector.extract_strided_slice %10 {offsets = [24, 0], sizes = [8, 128], strides = [1, 1]} : vector<64x128xf32> to vector<8x128xf32>
    %cst_14 = arith.constant dense<0.000000e+00> : vector<8x128xf32>
    %74 = tpu.matmul %72, %1, %cst_14 {dimension_numbers = #tpu.dot_dimension_numbers<[1], [0], [0], [1], [0, 0, 1, 1], [], []>} : vector<8x32xf32>, vector<32x128xf32>, vector<8x128xf32> -> vector<8x128xf32>
    %75 = arith.addf %73, %74 : vector<8x128xf32>
    %76 = math.tanh %75 : vector<8x128xf32>
    %77 = arith.negf %75 : vector<8x128xf32>
    %78 = math.exp %77 : vector<8x128xf32>
    %cst_15 = arith.constant 1.000000e+00 : f32
    %79 = vector.broadcast %cst_15 : f32 to vector<8x128xf32>
    %80 = arith.addf %79, %78 : vector<8x128xf32>
    %81 = arith.divf %79, %80 : vector<8x128xf32>
    %82 = arith.select %13, %76, %81 : vector<8x128xi1>, vector<8x128xf32>
    %83 = vector.extract_strided_slice %82 {offsets = [0, 0], sizes = [8, 32], strides = [1, 1]} : vector<8x128xf32> to vector<8x32xf32>
    %84 = vector.extract_strided_slice %82 {offsets = [0, 32], sizes = [8, 32], strides = [1, 1]} : vector<8x128xf32> to vector<8x32xf32>
    %85 = vector.extract_strided_slice %82 {offsets = [0, 64], sizes = [8, 32], strides = [1, 1]} : vector<8x128xf32> to vector<8x32xf32>
    %86 = vector.extract_strided_slice %82 {offsets = [0, 96], sizes = [8, 32], strides = [1, 1]} : vector<8x128xf32> to vector<8x32xf32>
    %87 = arith.mulf %84, %70 : vector<8x32xf32>
    %88 = arith.mulf %83, %86 : vector<8x32xf32>
    %89 = arith.addf %87, %88 : vector<8x32xf32>
    %90 = math.tanh %89 : vector<8x32xf32>
    %91 = arith.mulf %85, %90 : vector<8x32xf32>
    %92 = vector.extract_strided_slice %10 {offsets = [32, 0], sizes = [8, 128], strides = [1, 1]} : vector<64x128xf32> to vector<8x128xf32>
    %cst_16 = arith.constant dense<0.000000e+00> : vector<8x128xf32>
    %93 = tpu.matmul %91, %1, %cst_16 {dimension_numbers = #tpu.dot_dimension_numbers<[1], [0], [0], [1], [0, 0, 1, 1], [], []>} : vector<8x32xf32>, vector<32x128xf32>, vector<8x128xf32> -> vector<8x128xf32>
    %94 = arith.addf %92, %93 : vector<8x128xf32>
    %95 = math.tanh %94 : vector<8x128xf32>
    %96 = arith.negf %94 : vector<8x128xf32>
    %97 = math.exp %96 : vector<8x128xf32>
    %cst_17 = arith.constant 1.000000e+00 : f32
    %98 = vector.broadcast %cst_17 : f32 to vector<8x128xf32>
    %99 = arith.addf %98, %97 : vector<8x128xf32>
    %100 = arith.divf %98, %99 : vector<8x128xf32>
    %101 = arith.select %13, %95, %100 : vector<8x128xi1>, vector<8x128xf32>
    %102 = vector.extract_strided_slice %101 {offsets = [0, 0], sizes = [8, 32], strides = [1, 1]} : vector<8x128xf32> to vector<8x32xf32>
    %103 = vector.extract_strided_slice %101 {offsets = [0, 32], sizes = [8, 32], strides = [1, 1]} : vector<8x128xf32> to vector<8x32xf32>
    %104 = vector.extract_strided_slice %101 {offsets = [0, 64], sizes = [8, 32], strides = [1, 1]} : vector<8x128xf32> to vector<8x32xf32>
    %105 = vector.extract_strided_slice %101 {offsets = [0, 96], sizes = [8, 32], strides = [1, 1]} : vector<8x128xf32> to vector<8x32xf32>
    %106 = arith.mulf %103, %89 : vector<8x32xf32>
    %107 = arith.mulf %102, %105 : vector<8x32xf32>
    %108 = arith.addf %106, %107 : vector<8x32xf32>
    %109 = math.tanh %108 : vector<8x32xf32>
    %110 = arith.mulf %104, %109 : vector<8x32xf32>
    %111 = vector.extract_strided_slice %10 {offsets = [40, 0], sizes = [8, 128], strides = [1, 1]} : vector<64x128xf32> to vector<8x128xf32>
    %cst_18 = arith.constant dense<0.000000e+00> : vector<8x128xf32>
    %112 = tpu.matmul %110, %1, %cst_18 {dimension_numbers = #tpu.dot_dimension_numbers<[1], [0], [0], [1], [0, 0, 1, 1], [], []>} : vector<8x32xf32>, vector<32x128xf32>, vector<8x128xf32> -> vector<8x128xf32>
    %113 = arith.addf %111, %112 : vector<8x128xf32>
    %114 = math.tanh %113 : vector<8x128xf32>
    %115 = arith.negf %113 : vector<8x128xf32>
    %116 = math.exp %115 : vector<8x128xf32>
    %cst_19 = arith.constant 1.000000e+00 : f32
    %117 = vector.broadcast %cst_19 : f32 to vector<8x128xf32>
    %118 = arith.addf %117, %116 : vector<8x128xf32>
    %119 = arith.divf %117, %118 : vector<8x128xf32>
    %120 = arith.select %13, %114, %119 : vector<8x128xi1>, vector<8x128xf32>
    %121 = vector.extract_strided_slice %120 {offsets = [0, 0], sizes = [8, 32], strides = [1, 1]} : vector<8x128xf32> to vector<8x32xf32>
    %122 = vector.extract_strided_slice %120 {offsets = [0, 32], sizes = [8, 32], strides = [1, 1]} : vector<8x128xf32> to vector<8x32xf32>
    %123 = vector.extract_strided_slice %120 {offsets = [0, 64], sizes = [8, 32], strides = [1, 1]} : vector<8x128xf32> to vector<8x32xf32>
    %124 = vector.extract_strided_slice %120 {offsets = [0, 96], sizes = [8, 32], strides = [1, 1]} : vector<8x128xf32> to vector<8x32xf32>
    %125 = arith.mulf %122, %108 : vector<8x32xf32>
    %126 = arith.mulf %121, %124 : vector<8x32xf32>
    %127 = arith.addf %125, %126 : vector<8x32xf32>
    %128 = math.tanh %127 : vector<8x32xf32>
    %129 = arith.mulf %123, %128 : vector<8x32xf32>
    %130 = vector.extract_strided_slice %10 {offsets = [48, 0], sizes = [8, 128], strides = [1, 1]} : vector<64x128xf32> to vector<8x128xf32>
    %cst_20 = arith.constant dense<0.000000e+00> : vector<8x128xf32>
    %131 = tpu.matmul %129, %1, %cst_20 {dimension_numbers = #tpu.dot_dimension_numbers<[1], [0], [0], [1], [0, 0, 1, 1], [], []>} : vector<8x32xf32>, vector<32x128xf32>, vector<8x128xf32> -> vector<8x128xf32>
    %132 = arith.addf %130, %131 : vector<8x128xf32>
    %133 = math.tanh %132 : vector<8x128xf32>
    %134 = arith.negf %132 : vector<8x128xf32>
    %135 = math.exp %134 : vector<8x128xf32>
    %cst_21 = arith.constant 1.000000e+00 : f32
    %136 = vector.broadcast %cst_21 : f32 to vector<8x128xf32>
    %137 = arith.addf %136, %135 : vector<8x128xf32>
    %138 = arith.divf %136, %137 : vector<8x128xf32>
    %139 = arith.select %13, %133, %138 : vector<8x128xi1>, vector<8x128xf32>
    %140 = vector.extract_strided_slice %139 {offsets = [0, 0], sizes = [8, 32], strides = [1, 1]} : vector<8x128xf32> to vector<8x32xf32>
    %141 = vector.extract_strided_slice %139 {offsets = [0, 32], sizes = [8, 32], strides = [1, 1]} : vector<8x128xf32> to vector<8x32xf32>
    %142 = vector.extract_strided_slice %139 {offsets = [0, 64], sizes = [8, 32], strides = [1, 1]} : vector<8x128xf32> to vector<8x32xf32>
    %143 = vector.extract_strided_slice %139 {offsets = [0, 96], sizes = [8, 32], strides = [1, 1]} : vector<8x128xf32> to vector<8x32xf32>
    %144 = arith.mulf %141, %127 : vector<8x32xf32>
    %145 = arith.mulf %140, %143 : vector<8x32xf32>
    %146 = arith.addf %144, %145 : vector<8x32xf32>
    %147 = math.tanh %146 : vector<8x32xf32>
    %148 = arith.mulf %142, %147 : vector<8x32xf32>
    %149 = vector.extract_strided_slice %10 {offsets = [56, 0], sizes = [8, 128], strides = [1, 1]} : vector<64x128xf32> to vector<8x128xf32>
    %cst_22 = arith.constant dense<0.000000e+00> : vector<8x128xf32>
    %150 = tpu.matmul %148, %1, %cst_22 {dimension_numbers = #tpu.dot_dimension_numbers<[1], [0], [0], [1], [0, 0, 1, 1], [], []>} : vector<8x32xf32>, vector<32x128xf32>, vector<8x128xf32> -> vector<8x128xf32>
    %151 = arith.addf %149, %150 : vector<8x128xf32>
    %152 = math.tanh %151 : vector<8x128xf32>
    %153 = arith.negf %151 : vector<8x128xf32>
    %154 = math.exp %153 : vector<8x128xf32>
    %cst_23 = arith.constant 1.000000e+00 : f32
    %155 = vector.broadcast %cst_23 : f32 to vector<8x128xf32>
    %156 = arith.addf %155, %154 : vector<8x128xf32>
    %157 = arith.divf %155, %156 : vector<8x128xf32>
    %158 = arith.select %13, %152, %157 : vector<8x128xi1>, vector<8x128xf32>
    %159 = vector.extract_strided_slice %158 {offsets = [0, 0], sizes = [8, 32], strides = [1, 1]} : vector<8x128xf32> to vector<8x32xf32>
    %160 = vector.extract_strided_slice %158 {offsets = [0, 32], sizes = [8, 32], strides = [1, 1]} : vector<8x128xf32> to vector<8x32xf32>
    %161 = vector.extract_strided_slice %158 {offsets = [0, 64], sizes = [8, 32], strides = [1, 1]} : vector<8x128xf32> to vector<8x32xf32>
    %162 = vector.extract_strided_slice %158 {offsets = [0, 96], sizes = [8, 32], strides = [1, 1]} : vector<8x128xf32> to vector<8x32xf32>
    %163 = arith.mulf %160, %146 : vector<8x32xf32>
    %164 = arith.mulf %159, %162 : vector<8x32xf32>
    %165 = arith.addf %163, %164 : vector<8x32xf32>
    %166 = math.tanh %165 : vector<8x32xf32>
    %167 = arith.mulf %161, %166 : vector<8x32xf32>
    %cst_24 = arith.constant dense<0.000000e+00> : vector<8x128xf32>
    %168 = tpu.matmul %167, %2, %cst_24 {dimension_numbers = #tpu.dot_dimension_numbers<[1], [0], [0], [1], [0, 0, 1, 1], [], []>} : vector<8x32xf32>, vector<32x128xf32>, vector<8x128xf32> -> vector<8x128xf32>
    %169 = vector.broadcast %3 : vector<1x128xf32> to vector<8x128xf32>
    %170 = arith.addf %168, %169 : vector<8x128xf32>
    %171 = vector.extract_strided_slice %170 {offsets = [0, 0], sizes = [2, 8], strides = [1, 1]} : vector<8x128xf32> to vector<2x8xf32>
    %c0_25 = arith.constant 0 : index
    %c0_26 = arith.constant 0 : index
    %172 = vector.load %arg2[%c0_25, %c0_26] : memref<2x8xf32, #tpu.memory_space<vmem>>, vector<2x8xf32>
    tpu.vector_store %arg2[%c0_25, %c0_26], %171 {strides = array<i32>} : memref<2x8xf32, #tpu.memory_space<vmem>>, vector<2x8xf32>,
    return
  }
}

</mosaic_0001>

<llo_original>
// kernel: forward.1
$region0: #{forward.1}
  #allocation0 [shape = 'u32[]', space=smem, size = 0x4, offset = 0x4, fixed_abs, tag = 'smem constant byte address 0x4 - core index']
  #allocation1 [shape = 'u32[144,128]{1,0:T(1,128)}', space=vmem, size = 0x12000, scoped, tag = 'internal scratch']
  %s0 = inlined_call_operand.vmem [shape: s32[64,1], index: 0, kind: input, shape index: {}]
  %s1 = inlined_call_operand.hbm [shape: f32[136,128], index: 1, kind: input, shape index: {}]
  %s2 = inlined_call_operand.hbm [shape: f32[2,8], index: 2, kind: output, shape index: {}]
  %s3 = sld [smem:[#allocation0]]
  $region22: #{forward.1} parent=0
    _
  %s5 = ssub.s32 1, %s3
  %s6 = scalar_select 0, %s5, %s3
  $region1: #{forward.1} parent=0
    #allocation2 [shape = 'u8[69632]{0}', space=vmem, size = 0x11000, scoped, tag = 'input window, operand 1, single buffered']
    #allocation3 [shape = 's32[1]{0}', space=sflag, size = 0x4, scoped, tag = 'scoped memory for forward.1']
    #allocation4 [shape = 's32[1]{0}', space=sflag, size = 0x4, scoped, tag = 'scoped memory for forward.1']
    #allocation5 [shape = 'u8[1024]{0}', space=vmem, size = 0x400, scoped, tag = 'output window, operand 0, single buffered']
    %7 = vsyncpa [#allocation3], 0
    %8 = vsyncpa [#allocation4], 0
    // Predicated region
    $region2: #{forward.1} parent=1 // pred_check
      _
    $region3: #{forward.1} parent=1 // pred_check_branch
      %10 = sbr.rel (0) target = $region5
    $region4: #{forward.1} parent=1 // pred_region
      _
    $region5: #{forward.1} parent=1 // pred_fallthru
      _
    // Predicated region
    $region6: #{forward.1} parent=1 // pred_check
      _
    $region7: #{forward.1} parent=1 // pred_check_branch
      %12 = sbr.rel (0) target = $region9
    $region8: #{forward.1} parent=1 // pred_region
      %s14 = ssub.s32 2176, 2176
      %15 = vsyncadd [#allocation3], %s14
      %s16 = sshll.u32 [#allocation2], 4
      %s17 = int_to_ptr.vmem [resolvable:$true] %s16
      %22 = dma.hbm_to_vmem [thread:$0]  %s1, 2176, %s17, [#allocation3], 128, 128, 8
    $region9: #{forward.1} parent=1 // pred_fallthru
      _
    // Predicated region
    $region10: #{forward.1} parent=1 // pred_check
      _
    $region11: #{forward.1} parent=1 // pred_check_branch
      %24 = sbr.rel (0) target = $region13
    $region12: #{forward.1} parent=1 // pred_region
      %25 = dma.done [#allocation3], 2176
    $region13: #{forward.1} parent=1 // pred_fallthru
      _
    %v26 = vld [vmem:[#allocation2] sm:$0xff]
    %v27 = vld [vmem:[#allocation2 + $0x8] sm:$0xff]
    %v28 = vld [vmem:[#allocation2 + $0x10] sm:$0xff]
    %v29 = vld [vmem:[#allocation2 + $0x18] sm:$0xff]
    %v30 = vld [vmem:[#allocation2 + $0x20] sm:$0xff]
    %v31 = vld [vmem:[#allocation2 + $0x28] sm:$0xff]
    %v32 = vld [vmem:[#allocation2 + $0x30] sm:$0xff]
    %v33 = vld [vmem:[#allocation2 + $0x38] sm:$0xff]
    %v34 = vld [vmem:[#allocation2 + $0x40] sm:$0xff]
    %v35 = vld [vmem:[#allocation2 + $0x48] sm:$0xff]
    %v36 = vld [vmem:[#allocation2 + $0x50] sm:$0xff]
    %v37 = vld [vmem:[#allocation2 + $0x58] sm:$0xff]
    %v38 = vld [vmem:[#allocation2 + $0x60] sm:$0xff]
    %v39 = vld [vmem:[#allocation2 + $0x68] sm:$0xff]
    %v40 = vld [vmem:[#allocation2 + $0x70] sm:$0xff]
    %v41 = vld [vmem:[#allocation2 + $0x78] sm:$0xff]
    %v42 = vld [vmem:[#allocation2 + $0x80] sm:$0x1]
    %v43 = vld [vmem:[%s0] sm:$0xff]
    %v44 = vld [vmem:[%s0 + $0x8] sm:$0xff]
    %v45 = vld [vmem:[%s0 + $0x10] sm:$0xff]
    %v46 = vld [vmem:[%s0 + $0x18] sm:$0xff]
    %v47 = vld [vmem:[%s0 + $0x20] sm:$0xff]
    %v48 = vld [vmem:[%s0 + $0x28] sm:$0xff]
    %v49 = vld [vmem:[%s0 + $0x30] sm:$0xff]
    %v50 = vld [vmem:[%s0 + $0x38] sm:$0xff]
    %v51 = vlaneseq
    %v52 = vand.u32 %v51, 127
    %53 = vset.pattern.permute.xlu0 0
    %54 = vperm.xlu0 %53, %v43
    %v55 = vpop.permute.xlu0 %54
    %56 = vset.pattern.permute.xlu0 0
    %57 = vperm.xlu0 %56, %v44
    %v58 = vpop.permute.xlu0 %57
    %59 = vset.pattern.permute.xlu0 0
    %60 = vperm.xlu0 %59, %v45
    %v61 = vpop.permute.xlu0 %60
    %62 = vset.pattern.permute.xlu0 0
    %63 = vperm.xlu0 %62, %v46
    %v64 = vpop.permute.xlu0 %63
    %65 = vset.pattern.permute.xlu0 0
    %66 = vperm.xlu0 %65, %v47
    %v67 = vpop.permute.xlu0 %66
    %68 = vset.pattern.permute.xlu0 0
    %69 = vperm.xlu0 %68, %v48
    %v70 = vpop.permute.xlu0 %69
    %71 = vset.pattern.permute.xlu0 0
    %72 = vperm.xlu0 %71, %v49
    %v73 = vpop.permute.xlu0 %72
    %74 = vset.pattern.permute.xlu0 0
    %75 = vperm.xlu0 %74, %v50
    %v76 = vpop.permute.xlu0 %75
    %vm77 = vcmp.eq.s32.totalorder %v55, %v52
    %vm78 = vcmp.eq.s32.totalorder %v58, %v52
    %vm79 = vcmp.eq.s32.totalorder %v61, %v52
    %vm80 = vcmp.eq.s32.totalorder %v64, %v52
    %vm81 = vcmp.eq.s32.totalorder %v67, %v52
    %vm82 = vcmp.eq.s32.totalorder %v70, %v52
    %vm83 = vcmp.eq.s32.totalorder %v73, %v52
    %vm84 = vcmp.eq.s32.totalorder %v76, %v52
    %v85 = vsel %vm77, 1, 0
    %v86 = vsel %vm78, 1, 0
    %v87 = vsel %vm79, 1, 0
    %v88 = vsel %vm80, 1, 0
    %v89 = vsel %vm81, 1, 0
    %v90 = vsel %vm82, 1, 0
    %v91 = vsel %vm83, 1, 0
    %v92 = vsel %vm84, 1, 0
    %v93 = vcvt.s32.f32 %v85
    %v94 = vcvt.s32.f32 %v86
    %v95 = vcvt.s32.f32 %v87
    %v96 = vcvt.s32.f32 %v88
    %v97 = vcvt.s32.f32 %v89
    %v98 = vcvt.s32.f32 %v90
    %v99 = vcvt.s32.f32 %v91
    %v100 = vcvt.s32.f32 %v92
    %vm101 = vcmask 523264
    %v103 = vsel %vm101, %v93, 0
    %v106 = vsel %vm101, %v94, 0
    %v109 = vsel %vm101, %v95, 0
    %v112 = vsel %vm101, %v96, 0
    %v115 = vsel %vm101, %v97, 0
    %v118 = vsel %vm101, %v98, 0
    %v121 = vsel %vm101, %v99, 0
    %v124 = vsel %vm101, %v100, 0
    %126 = vmatprep.subr.mxu0 0.0
    %127 = vmatpush1.msra.mxu0 0.0
    %128 = vmatprep.subr.mxu0 0.0
    %129 = vmatpush1.msra.mxu0 0.0
    %130 = vmatprep.subr.mxu0 0.0
    %131 = vmatpush1.msra.mxu0 0.0
    %132 = vmatprep.subr.mxu0 0.0
    %133 = vmatpush1.msra.mxu0 0.0
    %134 = vmatprep.subr.mxu0 0.0
    %135 = vmatpush1.msra.mxu0 0.0
    %136 = vmatprep.subr.mxu0 0.0
    %137 = vmatpush1.msra.mxu0 0.0
    %138 = vmatprep.subr.mxu0 0.0
    %139 = vmatpush1.msra.mxu0 0.0
    %140 = vmatprep.subr.mxu0 0.0
    %141 = vmatpush1.msra.mxu0 0.0
    %142 = vmatprep.subr.mxu0 0.0
    %143 = vmatpush1.msra.mxu0 %v33
    %144 = vmatprep.subr.mxu0 0.0
    %145 = vmatpush1.msra.mxu0 %v32
    %146 = vmatprep.subr.mxu0 0.0
    %147 = vmatpush1.msra.mxu0 %v31
    %148 = vmatprep.subr.mxu0 0.0
    %149 = vmatpush1.msra.mxu0 %v30
    %150 = vmatprep.subr.mxu0 0.0
    %151 = vmatpush1.msra.mxu0 %v29
    %152 = vmatprep.subr.mxu0 0.0
    %153 = vmatpush1.msra.mxu0 %v28
    %154 = vmatprep.subr.mxu0 0.0
    %155 = vmatpush1.msra.mxu0 %v27
    %156 = vmatprep.subr.mxu0 0.0
    %157 = vmatpush1.msra.mxu0 %v26
    %158 = vmatprep.subr.mxu0 0.0
    %159 = vmatpush2.msra.mxu0 0.0
    %160 = vmatprep.subr.mxu0 0.0
    %161 = vmatpush2.msra.mxu0 0.0
    %162 = vmatprep.subr.mxu0 0.0
    %163 = vmatpush2.msra.mxu0 0.0
    %164 = vmatprep.subr.mxu0 0.0
    %165 = vmatpush2.msra.mxu0 0.0
    %166 = vmatprep.subr.mxu0 0.0
    %167 = vmatpush2.msra.mxu0 0.0
    %168 = vmatprep.subr.mxu0 0.0
    %169 = vmatpush2.msra.mxu0 0.0
    %170 = vmatprep.subr.mxu0 0.0
    %171 = vmatpush2.msra.mxu0 0.0
    %172 = vmatprep.subr.mxu0 0.0
    %173 = vmatpush2.msra.mxu0 0.0
    %174 = vmatprep.subr.mxu0 0.0
    %175 = vmatpush2.msra.mxu0 0.0
    %176 = vmatprep.subr.mxu0 0.0
    %177 = vmatpush2.msra.mxu0 0.0
    %178 = vmatprep.subr.mxu0 0.0
    %179 = vmatpush2.msra.mxu0 0.0
    %180 = vmatprep.subr.mxu0 0.0
    %181 = vmatpush2.msra.mxu0 0.0
    %182 = vmatprep.subr.mxu0 0.0
    %183 = vmatpush2.msra.mxu0 0.0
    %184 = vmatprep.subr.mxu0 0.0
    %185 = vmatpush2.msra.mxu0 0.0
    %186 = vmatprep.subr.mxu0 0.0
    %187 = vmatpush2.msra.mxu0 0.0
    %188 = vmatprep.subr.mxu0 0.0
    %189 = vmatpush2.msra.mxu0 0.0
    %190 = vmatprep.mubr.f32.mxu0 0.0
    %191 = vmatmul.mubr.f32.gmra.mxu0 %v103
    %v192 = vpop.f32.mrf.mxu0
    %v193 = vadd.f32 0.0, %v192
    %v194 = vpop.f32.mrf.mxu0
    %195 = vmatprep.mubr.f32.mxu0 0.0
    %196 = vmatmul.mubr.f32.gmra.mxu0 %v106
    %v197 = vpop.f32.mrf.mxu0
    %v198 = vadd.f32 0.0, %v197
    %v199 = vpop.f32.mrf.mxu0
    %200 = vmatprep.mubr.f32.mxu0 0.0
    %201 = vmatmul.mubr.f32.gmra.mxu0 %v109
    %v202 = vpop.f32.mrf.mxu0
    %v203 = vadd.f32 0.0, %v202
    %v204 = vpop.f32.mrf.mxu0
    %205 = vmatprep.mubr.f32.mxu0 0.0
    %206 = vmatmul.mubr.f32.gmra.mxu0 %v112
    %v207 = vpop.f32.mrf.mxu0
    %v208 = vadd.f32 0.0, %v207
    %v209 = vpop.f32.mrf.mxu0
    %210 = vmatprep.mubr.f32.mxu0 0.0
    %211 = vmatmul.mubr.f32.gmra.mxu0 %v115
    %v212 = vpop.f32.mrf.mxu0
    %v213 = vadd.f32 0.0, %v212
    %v214 = vpop.f32.mrf.mxu0
    %215 = vmatprep.mubr.f32.mxu0 0.0
    %216 = vmatmul.mubr.f32.gmra.mxu0 %v118
    %v217 = vpop.f32.mrf.mxu0
    %v218 = vadd.f32 0.0, %v217
    %v219 = vpop.f32.mrf.mxu0
    %220 = vmatprep.mubr.f32.mxu0 0.0
    %221 = vmatmul.mubr.f32.gmra.mxu0 %v121
    %v222 = vpop.f32.mrf.mxu0
    %v223 = vadd.f32 0.0, %v222
    %v224 = vpop.f32.mrf.mxu0
    %225 = vmatprep.mubr.f32.mxu0 0.0
    %226 = vmatmul.mubr.f32.gmra.mxu0 %v124
    %v227 = vpop.f32.mrf.mxu0
    %v228 = vadd.f32 0.0, %v227
    %v229 = vpop.f32.mrf.mxu0
    %230 = vdwg.mxu0
    %vm231 = vcmp.ge.s32.totalorder %v52, 96
    %vm232 = vcmask 261120
    %v234 = vsel %vm232, 0.0, 0
    %236 = vmatprep.subr.mxu0 0.0
    %237 = vmatpush1.msra.mxu0 0.0
    %238 = vmatprep.subr.mxu0 0.0
    %239 = vmatpush1.msra.mxu0 0.0
    %240 = vmatprep.subr.mxu0 0.0
    %241 = vmatpush1.msra.mxu0 0.0
    %242 = vmatprep.subr.mxu0 0.0
    %243 = vmatpush1.msra.mxu0 0.0
    %244 = vmatprep.subr.mxu0 0.0
    %245 = vmatpush1.msra.mxu0 0.0
    %246 = vmatprep.subr.mxu0 0.0
    %247 = vmatpush1.msra.mxu0 0.0
    %248 = vmatprep.subr.mxu0 0.0
    %249 = vmatpush1.msra.mxu0 0.0
    %250 = vmatprep.subr.mxu0 0.0
    %251 = vmatpush1.msra.mxu0 0.0
    %252 = vmatprep.subr.mxu0 0.0
    %253 = vmatpush1.msra.mxu0 0.0
    %254 = vmatprep.subr.mxu0 0.0
    %255 = vmatpush1.msra.mxu0 0.0
    %256 = vmatprep.subr.mxu0 0.0
    %257 = vmatpush1.msra.mxu0 0.0
    %258 = vmatprep.subr.mxu0 0.0
    %259 = vmatpush1.msra.mxu0 0.0
    %260 = vmatprep.subr.mxu0 0.0
    %261 = vmatpush1.msra.mxu0 %v37
    %262 = vmatprep.subr.mxu0 0.0
    %263 = vmatpush1.msra.mxu0 %v36
    %264 = vmatprep.subr.mxu0 0.0
    %265 = vmatpush1.msra.mxu0 %v35
    %266 = vmatprep.subr.mxu0 0.0
    %267 = vmatpush1.msra.mxu0 %v34
    %268 = vmatprep.subr.mxu0 0.0
    %269 = vmatpush2.msra.mxu0 0.0
    %270 = vmatprep.subr.mxu0 0.0
    %271 = vmatpush2.msra.mxu0 0.0
    %272 = vmatprep.subr.mxu0 0.0
    %273 = vmatpush2.msra.mxu0 0.0
    %274 = vmatprep.subr.mxu0 0.0
    %275 = vmatpush2.msra.mxu0 0.0
    %276 = vmatprep.subr.mxu0 0.0
    %277 = vmatpush2.msra.mxu0 0.0
    %278 = vmatprep.subr.mxu0 0.0
    %279 = vmatpush2.msra.mxu0 0.0
    %280 = vmatprep.subr.mxu0 0.0
    %281 = vmatpush2.msra.mxu0 0.0
    %282 = vmatprep.subr.mxu0 0.0
    %283 = vmatpush2.msra.mxu0 0.0
    %284 = vmatprep.subr.mxu0 0.0
    %285 = vmatpush2.msra.mxu0 0.0
    %286 = vmatprep.subr.mxu0 0.0
    %287 = vmatpush2.msra.mxu0 0.0
    %288 = vmatprep.subr.mxu0 0.0
    %289 = vmatpush2.msra.mxu0 0.0
    %290 = vmatprep.subr.mxu0 0.0
    %291 = vmatpush2.msra.mxu0 0.0
    %292 = vmatprep.subr.mxu0 0.0
    %293 = vmatpush2.msra.mxu0 0.0
    %294 = vmatprep.subr.mxu0 0.0
    %295 = vmatpush2.msra.mxu0 0.0
    %296 = vmatprep.subr.mxu0 0.0
    %297 = vmatpush2.msra.mxu0 0.0
    %298 = vmatprep.subr.mxu0 0.0
    %299 = vmatpush2.msra.mxu0 0.0
    %300 = vmatprep.mubr.f32.mxu0 0.0
    %301 = vmatmul.mubr.f32.gmra.mxu0 %v234
    %v302 = vpop.f32.mrf.mxu0
    %v303 = vadd.f32 0.0, %v302
    %v304 = vpop.f32.mrf.mxu0
    %305 = vdwg.mxu0
    %v306 = vadd.f32 %v193, %v303
    %v307 = vtanh.pop %v306
    %v308 = vxor.u32 %v306, 2147483648
    %v309 = vmul.f32 %v308, 1.442695
    %v310 = vpow.pop %v309
    %v311 = vadd.f32 %v310, 1.0
    %v312 = vrcp.pop %v311
    %v313 = vmul.f32 1.0, %v312
    %v314 = vsel %vm231, %v307, %v313
    %v315 = vmul.f32 %v314, 0.0
    %317 = vrot.lane.b32.xlu0 %v314, 32
    %v318 = vpop.permute.xlu0 %317
    %v320 = vmul.f32 %v314, %v318
    %322 = vrot.lane.b32.xlu0 %v320, 32
    %v323 = vpop.permute.xlu0 %322
    %v325 = vadd.f32 %v315, %v323
    %v326 = vtanh.pop %v325
    %328 = vrot.lane.b32.xlu0 %v326, 32
    %v329 = vpop.permute.xlu0 %328
    %v331 = vmul.f32 %v314, %v329
    %333 = vrot.lane.b32.xlu0 %v331, 64
    %v334 = vpop.permute.xlu0 %333
    %v335 = vsel %vm232, %v334, 0
    %337 = vmatprep.subr.mxu0 0.0
    %338 = vmatpush1.msra.mxu0 0.0
    %339 = vmatprep.subr.mxu0 0.0
    %340 = vmatpush1.msra.mxu0 0.0
    %341 = vmatprep.subr.mxu0 0.0
    %342 = vmatpush1.msra.mxu0 0.0
    %343 = vmatprep.subr.mxu0 0.0
    %344 = vmatpush1.msra.mxu0 0.0
    %345 = vmatprep.subr.mxu0 0.0
    %346 = vmatpush1.msra.mxu0 0.0
    %347 = vmatprep.subr.mxu0 0.0
    %348 = vmatpush1.msra.mxu0 0.0
    %349 = vmatprep.subr.mxu0 0.0
    %350 = vmatpush1.msra.mxu0 0.0
    %351 = vmatprep.subr.mxu0 0.0
    %352 = vmatpush1.msra.mxu0 0.0
    %353 = vmatprep.subr.mxu0 0.0
    %354 = vmatpush1.msra.mxu0 0.0
    %355 = vmatprep.subr.mxu0 0.0
    %356 = vmatpush1.msra.mxu0 0.0
    %357 = vmatprep.subr.mxu0 0.0
    %358 = vmatpush1.msra.mxu0 0.0
    %359 = vmatprep.subr.mxu0 0.0
    %360 = vmatpush1.msra.mxu0 0.0
    %361 = vmatprep.subr.mxu0 0.0
    %362 = vmatpush1.msra.mxu0 %v37
    %363 = vmatprep.subr.mxu0 0.0
    %364 = vmatpush1.msra.mxu0 %v36
    %365 = vmatprep.subr.mxu0 0.0
    %366 = vmatpush1.msra.mxu0 %v35
    %367 = vmatprep.subr.mxu0 0.0
    %368 = vmatpush1.msra.mxu0 %v34
    %369 = vmatprep.subr.mxu0 0.0
    %370 = vmatpush2.msra.mxu0 0.0
    %371 = vmatprep.subr.mxu0 0.0
    %372 = vmatpush2.msra.mxu0 0.0
    %373 = vmatprep.subr.mxu0 0.0
    %374 = vmatpush2.msra.mxu0 0.0
    %375 = vmatprep.subr.mxu0 0.0
    %376 = vmatpush2.msra.mxu0 0.0
    %377 = vmatprep.subr.mxu0 0.0
    %378 = vmatpush2.msra.mxu0 0.0
    %379 = vmatprep.subr.mxu0 0.0
    %380 = vmatpush2.msra.mxu0 0.0
    %381 = vmatprep.subr.mxu0 0.0
    %382 = vmatpush2.msra.mxu0 0.0
    %383 = vmatprep.subr.mxu0 0.0
    %384 = vmatpush2.msra.mxu0 0.0
    %385 = vmatprep.subr.mxu0 0.0
    %386 = vmatpush2.msra.mxu0 0.0
    %387 = vmatprep.subr.mxu0 0.0
    %388 = vmatpush2.msra.mxu0 0.0
    %389 = vmatprep.subr.mxu0 0.0
    %390 = vmatpush2.msra.mxu0 0.0
    %391 = vmatprep.subr.mxu0 0.0
    %392 = vmatpush2.msra.mxu0 0.0
    %393 = vmatprep.subr.mxu0 0.0
    %394 = vmatpush2.msra.mxu0 0.0
    %395 = vmatprep.subr.mxu0 0.0
    %396 = vmatpush2.msra.mxu0 0.0
    %397 = vmatprep.subr.mxu0 0.0
    %398 = vmatpush2.msra.mxu0 0.0
    %399 = vmatprep.subr.mxu0 0.0
    %400 = vmatpush2.msra.mxu0 0.0
    %401 = vmatprep.mubr.f32.mxu0 0.0
    %402 = vmatmul.mubr.f32.gmra.mxu0 %v335
    %v403 = vpop.f32.mrf.mxu0
    %v404 = vadd.f32 0.0, %v403
    %v405 = vpop.f32.mrf.mxu0
    %406 = vdwg.mxu0
    %v407 = vadd.f32 %v198, %v404
    %v408 = vtanh.pop %v407
    %v409 = vxor.u32 %v407, 2147483648
    %v410 = vmul.f32 %v409, 1.442695
    %v411 = vpow.pop %v410
    %v412 = vadd.f32 %v411, 1.0
    %v413 = vrcp.pop %v412
    %v414 = vmul.f32 1.0, %v413
    %v415 = vsel %vm231, %v408, %v414
    %v416 = vmul.f32 %v415, %v325
    %418 = vrot.lane.b32.xlu0 %v415, 32
    %v419 = vpop.permute.xlu0 %418
    %v421 = vmul.f32 %v415, %v419
    %423 = vrot.lane.b32.xlu0 %v421, 32
    %v424 = vpop.permute.xlu0 %423
    %v426 = vadd.f32 %v416, %v424
    %v427 = vtanh.pop %v426
    %429 = vrot.lane.b32.xlu0 %v427, 32
    %v430 = vpop.permute.xlu0 %429
    %v432 = vmul.f32 %v415, %v430
    %434 = vrot.lane.b32.xlu0 %v432, 64
    %v435 = vpop.permute.xlu0 %434
    %v436 = vsel %vm232, %v435, 0
    %438 = vmatprep.subr.mxu0 0.0
    %439 = vmatpush1.msra.mxu0 0.0
    %440 = vmatprep.subr.mxu0 0.0
    %441 = vmatpush1.msra.mxu0 0.0
    %442 = vmatprep.subr.mxu0 0.0
    %443 = vmatpush1.msra.mxu0 0.0
    %444 = vmatprep.subr.mxu0 0.0
    %445 = vmatpush1.msra.mxu0 0.0
    %446 = vmatprep.subr.mxu0 0.0
    %447 = vmatpush1.msra.mxu0 0.0
    %448 = vmatprep.subr.mxu0 0.0
    %449 = vmatpush1.msra.mxu0 0.0
    %450 = vmatprep.subr.mxu0 0.0
    %451 = vmatpush1.msra.mxu0 0.0
    %452 = vmatprep.subr.mxu0 0.0
    %453 = vmatpush1.msra.mxu0 0.0
    %454 = vmatprep.subr.mxu0 0.0
    %455 = vmatpush1.msra.mxu0 0.0
    %456 = vmatprep.subr.mxu0 0.0
    %457 = vmatpush1.msra.mxu0 0.0
    %458 = vmatprep.subr.mxu0 0.0
    %459 = vmatpush1.msra.mxu0 0.0
    %460 = vmatprep.subr.mxu0 0.0
    %461 = vmatpush1.msra.mxu0 0.0
    %462 = vmatprep.subr.mxu0 0.0
    %463 = vmatpush1.msra.mxu0 %v37
    %464 = vmatprep.subr.mxu0 0.0
    %465 = vmatpush1.msra.mxu0 %v36
    %466 = vmatprep.subr.mxu0 0.0
    %467 = vmatpush1.msra.mxu0 %v35
    %468 = vmatprep.subr.mxu0 0.0
    %469 = vmatpush1.msra.mxu0 %v34
    %470 = vmatprep.subr.mxu0 0.0
    %471 = vmatpush2.msra.mxu0 0.0
    %472 = vmatprep.subr.mxu0 0.0
    %473 = vmatpush2.msra.mxu0 0.0
    %474 = vmatprep.subr.mxu0 0.0
    %475 = vmatpush2.msra.mxu0 0.0
    %476 = vmatprep.subr.mxu0 0.0
    %477 = vmatpush2.msra.mxu0 0.0
    %478 = vmatprep.subr.mxu0 0.0
    %479 = vmatpush2.msra.mxu0 0.0
    %480 = vmatprep.subr.mxu0 0.0
    %481 = vmatpush2.msra.mxu0 0.0
    %482 = vmatprep.subr.mxu0 0.0
    %483 = vmatpush2.msra.mxu0 0.0
    %484 = vmatprep.subr.mxu0 0.0
    %485 = vmatpush2.msra.mxu0 0.0
    %486 = vmatprep.subr.mxu0 0.0
    %487 = vmatpush2.msra.mxu0 0.0
    %488 = vmatprep.subr.mxu0 0.0
    %489 = vmatpush2.msra.mxu0 0.0
    %490 = vmatprep.subr.mxu0 0.0
    %491 = vmatpush2.msra.mxu0 0.0
    %492 = vmatprep.subr.mxu0 0.0
    %493 = vmatpush2.msra.mxu0 0.0
    %494 = vmatprep.subr.mxu0 0.0
    %495 = vmatpush2.msra.mxu0 0.0
    %496 = vmatprep.subr.mxu0 0.0
    %497 = vmatpush2.msra.mxu0 0.0
    %498 = vmatprep.subr.mxu0 0.0
    %499 = vmatpush2.msra.mxu0 0.0
    %500 = vmatprep.subr.mxu0 0.0
    %501 = vmatpush2.msra.mxu0 0.0
    %502 = vmatprep.mubr.f32.mxu0 0.0
    %503 = vmatmul.mubr.f32.gmra.mxu0 %v436
    %v504 = vpop.f32.mrf.mxu0
    %v505 = vadd.f32 0.0, %v504
    %v506 = vpop.f32.mrf.mxu0
    %507 = vdwg.mxu0
    %v508 = vadd.f32 %v203, %v505
    %v509 = vtanh.pop %v508
    %v510 = vxor.u32 %v508, 2147483648
    %v511 = vmul.f32 %v510, 1.442695
    %v512 = vpow.pop %v511
    %v513 = vadd.f32 %v512, 1.0
    %v514 = vrcp.pop %v513
    %v515 = vmul.f32 1.0, %v514
    %v516 = vsel %vm231, %v509, %v515
    %v517 = vmul.f32 %v516, %v426
    %519 = vrot.lane.b32.xlu0 %v516, 32
    %v520 = vpop.permute.xlu0 %519
    %v522 = vmul.f32 %v516, %v520
    %524 = vrot.lane.b32.xlu0 %v522, 32
    %v525 = vpop.permute.xlu0 %524
    %v527 = vadd.f32 %v517, %v525
    %v528 = vtanh.pop %v527
    %530 = vrot.lane.b32.xlu0 %v528, 32
    %v531 = vpop.permute.xlu0 %530
    %v533 = vmul.f32 %v516, %v531
    %535 = vrot.lane.b32.xlu0 %v533, 64
    %v536 = vpop.permute.xlu0 %535
    %v537 = vsel %vm232, %v536, 0
    %539 = vmatprep.subr.mxu0 0.0
    %540 = vmatpush1.msra.mxu0 0.0
    %541 = vmatprep.subr.mxu0 0.0
    %542 = vmatpush1.msra.mxu0 0.0
    %543 = vmatprep.subr.mxu0 0.0
    %544 = vmatpush1.msra.mxu0 0.0
    %545 = vmatprep.subr.mxu0 0.0
    %546 = vmatpush1.msra.mxu0 0.0
    %547 = vmatprep.subr.mxu0 0.0
    %548 = vmatpush1.msra.mxu0 0.0
    %549 = vmatprep.subr.mxu0 0.0
    %550 = vmatpush1.msra.mxu0 0.0
    %551 = vmatprep.subr.mxu0 0.0
    %552 = vmatpush1.msra.mxu0 0.0
    %553 = vmatprep.subr.mxu0 0.0
    %554 = vmatpush1.msra.mxu0 0.0
    %555 = vmatprep.subr.mxu0 0.0
    %556 = vmatpush1.msra.mxu0 0.0
    %557 = vmatprep.subr.mxu0 0.0
    %558 = vmatpush1.msra.mxu0 0.0
    %559 = vmatprep.subr.mxu0 0.0
    %560 = vmatpush1.msra.mxu0 0.0
    %561 = vmatprep.subr.mxu0 0.0
    %562 = vmatpush1.msra.mxu0 0.0
    %563 = vmatprep.subr.mxu0 0.0
    %564 = vmatpush1.msra.mxu0 %v37
    %565 = vmatprep.subr.mxu0 0.0
    %566 = vmatpush1.msra.mxu0 %v36
    %567 = vmatprep.subr.mxu0 0.0
    %568 = vmatpush1.msra.mxu0 %v35
    %569 = vmatprep.subr.mxu0 0.0
    %570 = vmatpush1.msra.mxu0 %v34
    %571 = vmatprep.subr.mxu0 0.0
    %572 = vmatpush2.msra.mxu0 0.0
    %573 = vmatprep.subr.mxu0 0.0
    %574 = vmatpush2.msra.mxu0 0.0
    %575 = vmatprep.subr.mxu0 0.0
    %576 = vmatpush2.msra.mxu0 0.0
    %577 = vmatprep.subr.mxu0 0.0
    %578 = vmatpush2.msra.mxu0 0.0
    %579 = vmatprep.subr.mxu0 0.0
    %580 = vmatpush2.msra.mxu0 0.0
    %581 = vmatprep.subr.mxu0 0.0
    %582 = vmatpush2.msra.mxu0 0.0
    %583 = vmatprep.subr.mxu0 0.0
    %584 = vmatpush2.msra.mxu0 0.0
    %585 = vmatprep.subr.mxu0 0.0
    %586 = vmatpush2.msra.mxu0 0.0
    %587 = vmatprep.subr.mxu0 0.0
    %588 = vmatpush2.msra.mxu0 0.0
    %589 = vmatprep.subr.mxu0 0.0
    %590 = vmatpush2.msra.mxu0 0.0
    %591 = vmatprep.subr.mxu0 0.0
    %592 = vmatpush2.msra.mxu0 0.0
    %593 = vmatprep.subr.mxu0 0.0
    %594 = vmatpush2.msra.mxu0 0.0
    %595 = vmatprep.subr.mxu0 0.0
    %596 = vmatpush2.msra.mxu0 0.0
    %597 = vmatprep.subr.mxu0 0.0
    %598 = vmatpush2.msra.mxu0 0.0
    %599 = vmatprep.subr.mxu0 0.0
    %600 = vmatpush2.msra.mxu0 0.0
    %601 = vmatprep.subr.mxu0 0.0
    %602 = vmatpush2.msra.mxu0 0.0
    %603 = vmatprep.mubr.f32.mxu0 0.0
    %604 = vmatmul.mubr.f32.gmra.mxu0 %v537
    %v605 = vpop.f32.mrf.mxu0
    %v606 = vadd.f32 0.0, %v605
    %v607 = vpop.f32.mrf.mxu0
    %608 = vdwg.mxu0
    %v609 = vadd.f32 %v208, %v606
    %v610 = vtanh.pop %v609
    %v611 = vxor.u32 %v609, 2147483648
    %v612 = vmul.f32 %v611, 1.442695
    %v613 = vpow.pop %v612
    %v614 = vadd.f32 %v613, 1.0
    %v615 = vrcp.pop %v614
    %v616 = vmul.f32 1.0, %v615
    %v617 = vsel %vm231, %v610, %v616
    %v618 = vmul.f32 %v617, %v527
    %620 = vrot.lane.b32.xlu0 %v617, 32
    %v621 = vpop.permute.xlu0 %620
    %v623 = vmul.f32 %v617, %v621
    %625 = vrot.lane.b32.xlu0 %v623, 32
    %v626 = vpop.permute.xlu0 %625
    %v628 = vadd.f32 %v618, %v626
    %v629 = vtanh.pop %v628
    %631 = vrot.lane.b32.xlu0 %v629, 32
    %v632 = vpop.permute.xlu0 %631
    %v634 = vmul.f32 %v617, %v632
    %636 = vrot.lane.b32.xlu0 %v634, 64
    %v637 = vpop.permute.xlu0 %636
    %v638 = vsel %vm232, %v637, 0
    %640 = vmatprep.subr.mxu0 0.0
    %641 = vmatpush1.msra.mxu0 0.0
    %642 = vmatprep.subr.mxu0 0.0
    %643 = vmatpush1.msra.mxu0 0.0
    %644 = vmatprep.subr.mxu0 0.0
    %645 = vmatpush1.msra.mxu0 0.0
    %646 = vmatprep.subr.mxu0 0.0
    %647 = vmatpush1.msra.mxu0 0.0
    %648 = vmatprep.subr.mxu0 0.0
    %649 = vmatpush1.msra.mxu0 0.0
    %650 = vmatprep.subr.mxu0 0.0
    %651 = vmatpush1.msra.mxu0 0.0
    %652 = vmatprep.subr.mxu0 0.0
    %653 = vmatpush1.msra.mxu0 0.0
    %654 = vmatprep.subr.mxu0 0.0
    %655 = vmatpush1.msra.mxu0 0.0
    %656 = vmatprep.subr.mxu0 0.0
    %657 = vmatpush1.msra.mxu0 0.0
    %658 = vmatprep.subr.mxu0 0.0
    %659 = vmatpush1.msra.mxu0 0.0
    %660 = vmatprep.subr.mxu0 0.0
    %661 = vmatpush1.msra.mxu0 0.0
    %662 = vmatprep.subr.mxu0 0.0
    %663 = vmatpush1.msra.mxu0 0.0
    %664 = vmatprep.subr.mxu0 0.0
    %665 = vmatpush1.msra.mxu0 %v37
    %666 = vmatprep.subr.mxu0 0.0
    %667 = vmatpush1.msra.mxu0 %v36
    %668 = vmatprep.subr.mxu0 0.0
    %669 = vmatpush1.msra.mxu0 %v35
    %670 = vmatprep.subr.mxu0 0.0
    %671 = vmatpush1.msra.mxu0 %v34
    %672 = vmatprep.subr.mxu0 0.0
    %673 = vmatpush2.msra.mxu0 0.0
    %674 = vmatprep.subr.mxu0 0.0
    %675 = vmatpush2.msra.mxu0 0.0
    %676 = vmatprep.subr.mxu0 0.0
    %677 = vmatpush2.msra.mxu0 0.0
    %678 = vmatprep.subr.mxu0 0.0
    %679 = vmatpush2.msra.mxu0 0.0
    %680 = vmatprep.subr.mxu0 0.0
    %681 = vmatpush2.msra.mxu0 0.0
    %682 = vmatprep.subr.mxu0 0.0
    %683 = vmatpush2.msra.mxu0 0.0
    %684 = vmatprep.subr.mxu0 0.0
    %685 = vmatpush2.msra.mxu0 0.0
    %686 = vmatprep.subr.mxu0 0.0
    %687 = vmatpush2.msra.mxu0 0.0
    %688 = vmatprep.subr.mxu0 0.0
    %689 = vmatpush2.msra.mxu0 0.0
    %690 = vmatprep.subr.mxu0 0.0
    %691 = vmatpush2.msra.mxu0 0.0
    %692 = vmatprep.subr.mxu0 0.0
    %693 = vmatpush2.msra.mxu0 0.0
    %694 = vmatprep.subr.mxu0 0.0
    %695 = vmatpush2.msra.mxu0 0.0
    %696 = vmatprep.subr.mxu0 0.0
    %697 = vmatpush2.msra.mxu0 0.0
    %698 = vmatprep.subr.mxu0 0.0
    %699 = vmatpush2.msra.mxu0 0.0
    %700 = vmatprep.subr.mxu0 0.0
    %701 = vmatpush2.msra.mxu0 0.0
    %702 = vmatprep.subr.mxu0 0.0
    %703 = vmatpush2.msra.mxu0 0.0
    %704 = vmatprep.mubr.f32.mxu0 0.0
    %705 = vmatmul.mubr.f32.gmra.mxu0 %v638
    %v706 = vpop.f32.mrf.mxu0
    %v707 = vadd.f32 0.0, %v706
    %v708 = vpop.f32.mrf.mxu0
    %709 = vdwg.mxu0
    %v710 = vadd.f32 %v213, %v707
    %v711 = vtanh.pop %v710
    %v712 = vxor.u32 %v710, 2147483648
    %v713 = vmul.f32 %v712, 1.442695
    %v714 = vpow.pop %v713
    %v715 = vadd.f32 %v714, 1.0
    %v716 = vrcp.pop %v715
    %v717 = vmul.f32 1.0, %v716
    %v718 = vsel %vm231, %v711, %v717
    %v719 = vmul.f32 %v718, %v628
    %721 = vrot.lane.b32.xlu0 %v718, 32
    %v722 = vpop.permute.xlu0 %721
    %v724 = vmul.f32 %v718, %v722
    %726 = vrot.lane.b32.xlu0 %v724, 32
    %v727 = vpop.permute.xlu0 %726
    %v729 = vadd.f32 %v719, %v727
    %v730 = vtanh.pop %v729
    %732 = vrot.lane.b32.xlu0 %v730, 32
    %v733 = vpop.permute.xlu0 %732
    %v735 = vmul.f32 %v718, %v733
    %737 = vrot.lane.b32.xlu0 %v735, 64
    %v738 = vpop.permute.xlu0 %737
    %v739 = vsel %vm232, %v738, 0
    %741 = vmatprep.subr.mxu0 0.0
    %742 = vmatpush1.msra.mxu0 0.0
    %743 = vmatprep.subr.mxu0 0.0
    %744 = vmatpush1.msra.mxu0 0.0
    %745 = vmatprep.subr.mxu0 0.0
    %746 = vmatpush1.msra.mxu0 0.0
    %747 = vmatprep.subr.mxu0 0.0
    %748 = vmatpush1.msra.mxu0 0.0
    %749 = vmatprep.subr.mxu0 0.0
    %750 = vmatpush1.msra.mxu0 0.0
    %751 = vmatprep.subr.mxu0 0.0
    %752 = vmatpush1.msra.mxu0 0.0
    %753 = vmatprep.subr.mxu0 0.0
    %754 = vmatpush1.msra.mxu0 0.0
    %755 = vmatprep.subr.mxu0 0.0
    %756 = vmatpush1.msra.mxu0 0.0
    %757 = vmatprep.subr.mxu0 0.0
    %758 = vmatpush1.msra.mxu0 0.0
    %759 = vmatprep.subr.mxu0 0.0
    %760 = vmatpush1.msra.mxu0 0.0
    %761 = vmatprep.subr.mxu0 0.0
    %762 = vmatpush1.msra.mxu0 0.0
    %763 = vmatprep.subr.mxu0 0.0
    %764 = vmatpush1.msra.mxu0 0.0
    %765 = vmatprep.subr.mxu0 0.0
    %766 = vmatpush1.msra.mxu0 %v37
    %767 = vmatprep.subr.mxu0 0.0
    %768 = vmatpush1.msra.mxu0 %v36
    %769 = vmatprep.subr.mxu0 0.0
    %770 = vmatpush1.msra.mxu0 %v35
    %771 = vmatprep.subr.mxu0 0.0
    %772 = vmatpush1.msra.mxu0 %v34
    %773 = vmatprep.subr.mxu0 0.0
    %774 = vmatpush2.msra.mxu0 0.0
    %775 = vmatprep.subr.mxu0 0.0
    %776 = vmatpush2.msra.mxu0 0.0
    %777 = vmatprep.subr.mxu0 0.0
    %778 = vmatpush2.msra.mxu0 0.0
    %779 = vmatprep.subr.mxu0 0.0
    %780 = vmatpush2.msra.mxu0 0.0
    %781 = vmatprep.subr.mxu0 0.0
    %782 = vmatpush2.msra.mxu0 0.0
    %783 = vmatprep.subr.mxu0 0.0
    %784 = vmatpush2.msra.mxu0 0.0
    %785 = vmatprep.subr.mxu0 0.0
    %786 = vmatpush2.msra.mxu0 0.0
    %787 = vmatprep.subr.mxu0 0.0
    %788 = vmatpush2.msra.mxu0 0.0
    %789 = vmatprep.subr.mxu0 0.0
    %790 = vmatpush2.msra.mxu0 0.0
    %791 = vmatprep.subr.mxu0 0.0
    %792 = vmatpush2.msra.mxu0 0.0
    %793 = vmatprep.subr.mxu0 0.0
    %794 = vmatpush2.msra.mxu0 0.0
    %795 = vmatprep.subr.mxu0 0.0
    %796 = vmatpush2.msra.mxu0 0.0
    %797 = vmatprep.subr.mxu0 0.0
    %798 = vmatpush2.msra.mxu0 0.0
    %799 = vmatprep.subr.mxu0 0.0
    %800 = vmatpush2.msra.mxu0 0.0
    %801 = vmatprep.subr.mxu0 0.0
    %802 = vmatpush2.msra.mxu0 0.0
    %803 = vmatprep.subr.mxu0 0.0
    %804 = vmatpush2.msra.mxu0 0.0
    %805 = vmatprep.mubr.f32.mxu0 0.0
    %806 = vmatmul.mubr.f32.gmra.mxu0 %v739
    %v807 = vpop.f32.mrf.mxu0
    %v808 = vadd.f32 0.0, %v807
    %v809 = vpop.f32.mrf.mxu0
    %810 = vdwg.mxu0
    %v811 = vadd.f32 %v218, %v808
    %v812 = vtanh.pop %v811
    %v813 = vxor.u32 %v811, 2147483648
    %v814 = vmul.f32 %v813, 1.442695
    %v815 = vpow.pop %v814
    %v816 = vadd.f32 %v815, 1.0
    %v817 = vrcp.pop %v816
    %v818 = vmul.f32 1.0, %v817
    %v819 = vsel %vm231, %v812, %v818
    %v820 = vmul.f32 %v819, %v729
    %822 = vrot.lane.b32.xlu0 %v819, 32
    %v823 = vpop.permute.xlu0 %822
    %v825 = vmul.f32 %v819, %v823
    %827 = vrot.lane.b32.xlu0 %v825, 32
    %v828 = vpop.permute.xlu0 %827
    %v830 = vadd.f32 %v820, %v828
    %v831 = vtanh.pop %v830
    %833 = vrot.lane.b32.xlu0 %v831, 32
    %v834 = vpop.permute.xlu0 %833
    %v836 = vmul.f32 %v819, %v834
    %838 = vrot.lane.b32.xlu0 %v836, 64
    %v839 = vpop.permute.xlu0 %838
    %v840 = vsel %vm232, %v839, 0
    %842 = vmatprep.subr.mxu0 0.0
    %843 = vmatpush1.msra.mxu0 0.0
    %844 = vmatprep.subr.mxu0 0.0
    %845 = vmatpush1.msra.mxu0 0.0
    %846 = vmatprep.subr.mxu0 0.0
    %847 = vmatpush1.msra.mxu0 0.0
    %848 = vmatprep.subr.mxu0 0.0
    %849 = vmatpush1.msra.mxu0 0.0
    %850 = vmatprep.subr.mxu0 0.0
    %851 = vmatpush1.msra.mxu0 0.0
    %852 = vmatprep.subr.mxu0 0.0
    %853 = vmatpush1.msra.mxu0 0.0
    %854 = vmatprep.subr.mxu0 0.0
    %855 = vmatpush1.msra.mxu0 0.0
    %856 = vmatprep.subr.mxu0 0.0
    %857 = vmatpush1.msra.mxu0 0.0
    %858 = vmatprep.subr.mxu0 0.0
    %859 = vmatpush1.msra.mxu0 0.0
    %860 = vmatprep.subr.mxu0 0.0
    %861 = vmatpush1.msra.mxu0 0.0
    %862 = vmatprep.subr.mxu0 0.0
    %863 = vmatpush1.msra.mxu0 0.0
    %864 = vmatprep.subr.mxu0 0.0
    %865 = vmatpush1.msra.mxu0 0.0
    %866 = vmatprep.subr.mxu0 0.0
    %867 = vmatpush1.msra.mxu0 %v37
    %868 = vmatprep.subr.mxu0 0.0
    %869 = vmatpush1.msra.mxu0 %v36
    %870 = vmatprep.subr.mxu0 0.0
    %871 = vmatpush1.msra.mxu0 %v35
    %872 = vmatprep.subr.mxu0 0.0
    %873 = vmatpush1.msra.mxu0 %v34
    %874 = vmatprep.subr.mxu0 0.0
    %875 = vmatpush2.msra.mxu0 0.0
    %876 = vmatprep.subr.mxu0 0.0
    %877 = vmatpush2.msra.mxu0 0.0
    %878 = vmatprep.subr.mxu0 0.0
    %879 = vmatpush2.msra.mxu0 0.0
    %880 = vmatprep.subr.mxu0 0.0
    %881 = vmatpush2.msra.mxu0 0.0
    %882 = vmatprep.subr.mxu0 0.0
    %883 = vmatpush2.msra.mxu0 0.0
    %884 = vmatprep.subr.mxu0 0.0
    %885 = vmatpush2.msra.mxu0 0.0
    %886 = vmatprep.subr.mxu0 0.0
    %887 = vmatpush2.msra.mxu0 0.0
    %888 = vmatprep.subr.mxu0 0.0
    %889 = vmatpush2.msra.mxu0 0.0
    %890 = vmatprep.subr.mxu0 0.0
    %891 = vmatpush2.msra.mxu0 0.0
    %892 = vmatprep.subr.mxu0 0.0
    %893 = vmatpush2.msra.mxu0 0.0
    %894 = vmatprep.subr.mxu0 0.0
    %895 = vmatpush2.msra.mxu0 0.0
    %896 = vmatprep.subr.mxu0 0.0
    %897 = vmatpush2.msra.mxu0 0.0
    %898 = vmatprep.subr.mxu0 0.0
    %899 = vmatpush2.msra.mxu0 0.0
    %900 = vmatprep.subr.mxu0 0.0
    %901 = vmatpush2.msra.mxu0 0.0
    %902 = vmatprep.subr.mxu0 0.0
    %903 = vmatpush2.msra.mxu0 0.0
    %904 = vmatprep.subr.mxu0 0.0
    %905 = vmatpush2.msra.mxu0 0.0
    %906 = vmatprep.mubr.f32.mxu0 0.0
    %907 = vmatmul.mubr.f32.gmra.mxu0 %v840
    %v908 = vpop.f32.mrf.mxu0
    %v909 = vadd.f32 0.0, %v908
    %v910 = vpop.f32.mrf.mxu0
    %911 = vdwg.mxu0
    %v912 = vadd.f32 %v223, %v909
    %v913 = vtanh.pop %v912
    %v914 = vxor.u32 %v912, 2147483648
    %v915 = vmul.f32 %v914, 1.442695
    %v916 = vpow.pop %v915
    %v917 = vadd.f32 %v916, 1.0
    %v918 = vrcp.pop %v917
    %v919 = vmul.f32 1.0, %v918
    %v920 = vsel %vm231, %v913, %v919
    %v921 = vmul.f32 %v920, %v830
    %923 = vrot.lane.b32.xlu0 %v920, 32
    %v924 = vpop.permute.xlu0 %923
    %v926 = vmul.f32 %v920, %v924
    %928 = vrot.lane.b32.xlu0 %v926, 32
    %v929 = vpop.permute.xlu0 %928
    %v931 = vadd.f32 %v921, %v929
    %v932 = vtanh.pop %v931
    %934 = vrot.lane.b32.xlu0 %v932, 32
    %v935 = vpop.permute.xlu0 %934
    %v937 = vmul.f32 %v920, %v935
    %939 = vrot.lane.b32.xlu0 %v937, 64
    %v940 = vpop.permute.xlu0 %939
    %v941 = vsel %vm232, %v940, 0
    %943 = vmatprep.subr.mxu0 0.0
    %944 = vmatpush1.msra.mxu0 0.0
    %945 = vmatprep.subr.mxu0 0.0
    %946 = vmatpush1.msra.mxu0 0.0
    %947 = vmatprep.subr.mxu0 0.0
    %948 = vmatpush1.msra.mxu0 0.0
    %949 = vmatprep.subr.mxu0 0.0
    %950 = vmatpush1.msra.mxu0 0.0
    %951 = vmatprep.subr.mxu0 0.0
    %952 = vmatpush1.msra.mxu0 0.0
    %953 = vmatprep.subr.mxu0 0.0
    %954 = vmatpush1.msra.mxu0 0.0
    %955 = vmatprep.subr.mxu0 0.0
    %956 = vmatpush1.msra.mxu0 0.0
    %957 = vmatprep.subr.mxu0 0.0
    %958 = vmatpush1.msra.mxu0 0.0
    %959 = vmatprep.subr.mxu0 0.0
    %960 = vmatpush1.msra.mxu0 0.0
    %961 = vmatprep.subr.mxu0 0.0
    %962 = vmatpush1.msra.mxu0 0.0
    %963 = vmatprep.subr.mxu0 0.0
    %964 = vmatpush1.msra.mxu0 0.0
    %965 = vmatprep.subr.mxu0 0.0
    %966 = vmatpush1.msra.mxu0 0.0
    %967 = vmatprep.subr.mxu0 0.0
    %968 = vmatpush1.msra.mxu0 %v37
    %969 = vmatprep.subr.mxu0 0.0
    %970 = vmatpush1.msra.mxu0 %v36
    %971 = vmatprep.subr.mxu0 0.0
    %972 = vmatpush1.msra.mxu0 %v35
    %973 = vmatprep.subr.mxu0 0.0
    %974 = vmatpush1.msra.mxu0 %v34
    %975 = vmatprep.subr.mxu0 0.0
    %976 = vmatpush2.msra.mxu0 0.0
    %977 = vmatprep.subr.mxu0 0.0
    %978 = vmatpush2.msra.mxu0 0.0
    %979 = vmatprep.subr.mxu0 0.0
    %980 = vmatpush2.msra.mxu0 0.0
    %981 = vmatprep.subr.mxu0 0.0
    %982 = vmatpush2.msra.mxu0 0.0
    %983 = vmatprep.subr.mxu0 0.0
    %984 = vmatpush2.msra.mxu0 0.0
    %985 = vmatprep.subr.mxu0 0.0
    %986 = vmatpush2.msra.mxu0 0.0
    %987 = vmatprep.subr.mxu0 0.0
    %988 = vmatpush2.msra.mxu0 0.0
    %989 = vmatprep.subr.mxu0 0.0
    %990 = vmatpush2.msra.mxu0 0.0
    %991 = vmatprep.subr.mxu0 0.0
    %992 = vmatpush2.msra.mxu0 0.0
    %993 = vmatprep.subr.mxu0 0.0
    %994 = vmatpush2.msra.mxu0 0.0
    %995 = vmatprep.subr.mxu0 0.0
    %996 = vmatpush2.msra.mxu0 0.0
    %997 = vmatprep.subr.mxu0 0.0
    %998 = vmatpush2.msra.mxu0 0.0
    %999 = vmatprep.subr.mxu0 0.0
    %1000 = vmatpush2.msra.mxu0 0.0
    %1001 = vmatprep.subr.mxu0 0.0
    %1002 = vmatpush2.msra.mxu0 0.0
    %1003 = vmatprep.subr.mxu0 0.0
    %1004 = vmatpush2.msra.mxu0 0.0
    %1005 = vmatprep.subr.mxu0 0.0
    %1006 = vmatpush2.msra.mxu0 0.0
    %1007 = vmatprep.mubr.f32.mxu0 0.0
    %1008 = vmatmul.mubr.f32.gmra.mxu0 %v941
    %v1009 = vpop.f32.mrf.mxu0
    %v1010 = vadd.f32 0.0, %v1009
    %v1011 = vpop.f32.mrf.mxu0
    %1012 = vdwg.mxu0
    %v1013 = vadd.f32 %v228, %v1010
    %v1014 = vtanh.pop %v1013
    %v1015 = vxor.u32 %v1013, 2147483648
    %v1016 = vmul.f32 %v1015, 1.442695
    %v1017 = vpow.pop %v1016
    %v1018 = vadd.f32 %v1017, 1.0
    %v1019 = vrcp.pop %v1018
    %v1020 = vmul.f32 1.0, %v1019
    %v1021 = vsel %vm231, %v1014, %v1020
    %v1022 = vmul.f32 %v1021, %v931
    %1024 = vrot.lane.b32.xlu0 %v1021, 32
    %v1025 = vpop.permute.xlu0 %1024
    %v1027 = vmul.f32 %v1021, %v1025
    %1029 = vrot.lane.b32.xlu0 %v1027, 32
    %v1030 = vpop.permute.xlu0 %1029
    %v1032 = vadd.f32 %v1022, %v1030
    %v1033 = vtanh.pop %v1032
    %1035 = vrot.lane.b32.xlu0 %v1033, 32
    %v1036 = vpop.permute.xlu0 %1035
    %v1038 = vmul.f32 %v1021, %v1036
    %v1039 = vlaneseq
    %v1040 = vshrl.u32 %v1039, 7
    %v1041 = vsub.s32 0, %v1040
    %v1042 = vrot.slane %v42, %v1041
    %1044 = vrot.lane.b32.xlu0 %v1038, 64
    %v1045 = vpop.permute.xlu0 %1044
    %v1046 = vsel %vm232, %v1045, 0
    %1048 = vmatprep.subr.mxu0 0.0
    %1049 = vmatpush1.msra.mxu0 0.0
    %1050 = vmatprep.subr.mxu0 0.0
    %1051 = vmatpush1.msra.mxu0 0.0
    %1052 = vmatprep.subr.mxu0 0.0
    %1053 = vmatpush1.msra.mxu0 0.0
    %1054 = vmatprep.subr.mxu0 0.0
    %1055 = vmatpush1.msra.mxu0 0.0
    %1056 = vmatprep.subr.mxu0 0.0
    %1057 = vmatpush1.msra.mxu0 0.0
    %1058 = vmatprep.subr.mxu0 0.0
    %1059 = vmatpush1.msra.mxu0 0.0
    %1060 = vmatprep.subr.mxu0 0.0
    %1061 = vmatpush1.msra.mxu0 0.0
    %1062 = vmatprep.subr.mxu0 0.0
    %1063 = vmatpush1.msra.mxu0 0.0
    %1064 = vmatprep.subr.mxu0 0.0
    %1065 = vmatpush1.msra.mxu0 0.0
    %1066 = vmatprep.subr.mxu0 0.0
    %1067 = vmatpush1.msra.mxu0 0.0
    %1068 = vmatprep.subr.mxu0 0.0
    %1069 = vmatpush1.msra.mxu0 0.0
    %1070 = vmatprep.subr.mxu0 0.0
    %1071 = vmatpush1.msra.mxu0 0.0
    %1072 = vmatprep.subr.mxu0 0.0
    %1073 = vmatpush1.msra.mxu0 %v41
    %1074 = vmatprep.subr.mxu0 0.0
    %1075 = vmatpush1.msra.mxu0 %v40
    %1076 = vmatprep.subr.mxu0 0.0
    %1077 = vmatpush1.msra.mxu0 %v39
    %1078 = vmatprep.subr.mxu0 0.0
    %1079 = vmatpush1.msra.mxu0 %v38
    %1080 = vmatprep.subr.mxu0 0.0
    %1081 = vmatpush2.msra.mxu0 0.0
    %1082 = vmatprep.subr.mxu0 0.0
    %1083 = vmatpush2.msra.mxu0 0.0
    %1084 = vmatprep.subr.mxu0 0.0
    %1085 = vmatpush2.msra.mxu0 0.0
    %1086 = vmatprep.subr.mxu0 0.0
    %1087 = vmatpush2.msra.mxu0 0.0
    %1088 = vmatprep.subr.mxu0 0.0
    %1089 = vmatpush2.msra.mxu0 0.0
    %1090 = vmatprep.subr.mxu0 0.0
    %1091 = vmatpush2.msra.mxu0 0.0
    %1092 = vmatprep.subr.mxu0 0.0
    %1093 = vmatpush2.msra.mxu0 0.0
    %1094 = vmatprep.subr.mxu0 0.0
    %1095 = vmatpush2.msra.mxu0 0.0
    %1096 = vmatprep.subr.mxu0 0.0
    %1097 = vmatpush2.msra.mxu0 0.0
    %1098 = vmatprep.subr.mxu0 0.0
    %1099 = vmatpush2.msra.mxu0 0.0
    %1100 = vmatprep.subr.mxu0 0.0
    %1101 = vmatpush2.msra.mxu0 0.0
    %1102 = vmatprep.subr.mxu0 0.0
    %1103 = vmatpush2.msra.mxu0 0.0
    %1104 = vmatprep.subr.mxu0 0.0
    %1105 = vmatpush2.msra.mxu0 0.0
    %1106 = vmatprep.subr.mxu0 0.0
    %1107 = vmatpush2.msra.mxu0 0.0
    %1108 = vmatprep.subr.mxu0 0.0
    %1109 = vmatpush2.msra.mxu0 0.0
    %1110 = vmatprep.subr.mxu0 0.0
    %1111 = vmatpush2.msra.mxu0 0.0
    %1112 = vmatprep.mubr.f32.mxu0 0.0
    %1113 = vmatmul.mubr.f32.gmra.mxu0 %v1046
    %v1114 = vpop.f32.mrf.mxu0
    %v1115 = vadd.f32 %v1042, %v1114
    %v1116 = vpop.f32.mrf.mxu0
    %1117 = vdwg.mxu0
    %vm1118 = vcmask 58368
    %1119 = vst.msk [vmem:[#allocation5] sm:$0x3] %vm1118, %v1115
    // Predicated region
    $region14: #{forward.1} parent=1 // pred_check
      _
    $region15: #{forward.1} parent=1 // pred_check_branch
      %1121 = sbr.rel (0) target = $region17
    $region16: #{forward.1} parent=1 // pred_region
      %s1123 = ssub.s32 32, 32
      %1124 = vsyncadd [#allocation4], %s1123
      %s1126 = sshll.u32 [#allocation5], 4
      %s1127 = int_to_ptr.vmem [resolvable:$true] %s1126
      %1129 = dma.vmem_to_hbm [thread:$0]  %s1127, 32, %s2, [#allocation4]
    $region17: #{forward.1} parent=1 // pred_fallthru
      _
    // Predicated region
    $region18: #{forward.1} parent=1 // pred_check
      _
    $region19: #{forward.1} parent=1 // pred_check_branch
      %1131 = sbr.rel (0) target = $region21
    $region20: #{forward.1} parent=1 // pred_region
      %1132 = dma.done [#allocation4], 32
    $region21: #{forward.1} parent=1 // pred_fallthru
      _
    %1133 = vsyncpa [#allocation3], 1
    %1134 = vsyncpa [#allocation4], 1

</llo_original>
